<compile_context>
chip_gen: v7x
topology: tpu7x:2x2x1
jax: 0.10.0
libtpu: 0.0.40
codegen_flags: <defaults>
</compile_context>

<pallas_src>
import jax
import jax.numpy as jnp
from jax import lax
from jax.experimental import pallas as pl
from jax.experimental.pallas import tpu as pltpu

LATENT_DIM = 32
CLASS_DIM = 10


# ----------------------------- Pallas kernel -------------------------------


def mlp_classifier_kernel(z_ref, w_ref, b_ref, o_ref):
    # z_ref: (tm, K)   w_ref: (N, K)  (PyTorch nn.Linear layout)
    # b_ref: (1, N)    o_ref: (tm, N)
    z = jnp.maximum(z_ref[...], 0.0)                      # fused ReLU (VPU)
    y = lax.dot_general(                                  # MXU: z @ w.T
        z,
        w_ref[...],
        dimension_numbers=(((1,), (1,)), ((), ())),
        preferred_element_type=jnp.float32,
    )
    o_ref[...] = (y + b_ref[...]).astype(o_ref.dtype)


# ------------------------------- wrapper ------------------------------------


def _pick_tm(B, *, max_tm=8192, split_threshold=2048):
    """Batch tile size.

    - Small B: one full-extent block (legal even when B < 8, since block dim
      equals the array dim).
    - Large B: split into >= 2 grid steps (dual-TC / megacore sharding), each a
      multiple of 8 rows, capped at max_tm to bound VMEM and keep pipelining.
    """
    if B <= split_threshold:
        return B
    half = -(-B // 2)                      # cdiv(B, 2)
    tm = min(max_tm, ((half + 7) // 8) * 8)
    return tm


def mlp_classifier(z, weight, bias, *, max_block_b=8192, compute_dtype=None):
    """y = Linear(relu(z)) with PyTorch-layout params.

    z:      (B, latent_dim)
    weight: (class_dim, latent_dim)   -- PyTorch nn.Linear weight layout
    bias:   (class_dim,)
    compute_dtype: optionally cast z/weight (e.g. jnp.bfloat16) at the kernel
      boundary; accumulation stays f32 and the output is f32. Default None
      keeps the module's f32 numerics exactly.
    """
    B, K = z.shape
    N = weight.shape[0]
    assert weight.shape == (N, K)

    if compute_dtype is not None:
        z = z.astype(compute_dtype)
        weight = weight.astype(compute_dtype)

    b2d = bias.reshape(1, N).astype(jnp.float32)

    tm = _pick_tm(B, max_tm=max_block_b)
    grid = (pl.cdiv(B, tm),)               # remainder rows masked on store

    in_bytes = B * K * z.dtype.itemsize + K * N * weight.dtype.itemsize + N * 4
    out_bytes = B * N * 4
    cost = pl.CostEstimate(
        flops=2 * B * K * N,
        transcendentals=0,
        bytes_accessed=in_bytes + out_bytes,
    )

    return pl.pallas_call(
        mlp_classifier_kernel,
        out_shape=jax.ShapeDtypeStruct((B, N), jnp.float32),
        grid=grid,
        in_specs=[
            pl.BlockSpec((tm, K), lambda i: (i, 0)),   # batch-tiled activations
            pl.BlockSpec((N, K), lambda i: (0, 0)),    # full weight, resident
            pl.BlockSpec((1, N), lambda i: (0, 0)),    # bias
        ],
        out_specs=pl.BlockSpec((tm, N), lambda i: (i, 0)),
        compiler_params=pltpu.CompilerParams(
            dimension_semantics=("parallel",),
        ),
        cost_estimate=cost,
    )(z, weight, b2d)


# ------------------------------ parameters ----------------------------------


def init_params(key, latent_dim=LATENT_DIM, class_dim=CLASS_DIM):
    kw, kb = jax.random.split(key)
    # PyTorch nn.Linear layout: weight (out_features, in_features), bias (out,)
    weight = 0.05 * jax.random.normal(kw, (class_dim, latent_dim), dtype=jnp.float32)
    bias = 0.05 * jax.random.normal(kb, (class_dim,), dtype=jnp.float32)
    return {"weight": weight, "bias": bias}


# --------------------------------- main --------------------------------------


if __name__ == "__main__":
    key = jax.random.PRNGKey(0)
    pkey, zkey = jax.random.split(key)
    params = init_params(pkey, LATENT_DIM, CLASS_DIM)

    # Small input consistent with the module: batch=2, latent_dim=32.
    z = jax.random.normal(zkey, (2, LATENT_DIM), dtype=jnp.float32)

    fwd = jax.jit(lambda z, p: mlp_classifier(z, p["weight"], p["bias"]))
    y = fwd(z, params)
    jax.block_until_ready(y)

    # Pure-JAX reference: y = relu(z) @ W.T + b
    y_ref = jnp.maximum(z, 0.0) @ params["weight"].T + params["bias"]

    assert y.shape == (2, CLASS_DIM), y.shape
    assert y.dtype == jnp.float32, y.dtype
    assert jnp.allclose(y, y_ref, rtol=1e-3, atol=1e-3), (
        float(jnp.max(jnp.abs(y - y_ref)))
    )

    # Also exercise the large-batch tiling path (multi-step grid, remainder
    # rows, tm multiple of 8) to make sure the perf-tuned config is correct.
    zb = jax.random.normal(jax.random.PRNGKey(1), (5000, LATENT_DIM), jnp.float32)
    yb = jax.jit(lambda z, p: mlp_classifier(z, p["weight"], p["bias"]))(zb, params)
    jax.block_until_ready(yb)
    yb_ref = jnp.maximum(zb, 0.0) @ params["weight"].T + params["bias"]
    assert yb.shape == (5000, CLASS_DIM), yb.shape
    assert jnp.allclose(yb, yb_ref, rtol=1e-3, atol=1e-3), (
        float(jnp.max(jnp.abs(yb - yb_ref)))
    )

    print("KERNEL_OK")
</pallas_src>

<mosaic_0001>
module attributes {stable_mosaic.version = 11 : i64} {
  func.func @mlp_classifier_kernel(%arg0: i32, %arg1: memref<2x32xf32, #tpu.memory_space<vmem>>, %arg2: memref<10x32xf32, #tpu.memory_space<vmem>>, %arg3: memref<1x10xf32, #tpu.memory_space<vmem>>, %arg4: memref<2x10xf32, #tpu.memory_space<vmem>>) attributes {dimension_semantics = [#tpu.dimension_semantics<parallel>], iteration_bounds = array<i64: 1>, scalar_prefetch = 0 : i64, scratch_operands = 0 : i64, tpu.core_type = #tpu.core_type<tc>, window_params = [{transform_indices = @transform_0, window_bounds = array<i64: 2, 32>}, {pipeline_mode = #tpu.pipeline_mode<synchronous>, transform_indices = @transform_1, window_bounds = array<i64: 10, 32>}, {pipeline_mode = #tpu.pipeline_mode<synchronous>, transform_indices = @transform_2, window_bounds = array<i64: 1, 10>}, {transform_indices = @transform_3, window_bounds = array<i64: 2, 10>}]} {
    %c0 = arith.constant 0 : index
    %c0_0 = arith.constant 0 : index
    %0 = vector.load %arg1[%c0, %c0_0] : memref<2x32xf32, #tpu.memory_space<vmem>>, vector<2x32xf32>
    %cst = arith.constant 0.000000e+00 : f32
    %1 = vector.broadcast %cst : f32 to vector<2x32xf32>
    %2 = arith.maximumf %0, %1 : vector<2x32xf32>
    %c0_1 = arith.constant 0 : index
    %c0_2 = arith.constant 0 : index
    %3 = vector.load %arg2[%c0_1, %c0_2] : memref<10x32xf32, #tpu.memory_space<vmem>>, vector<10x32xf32>
    %cst_3 = arith.constant dense<0.000000e+00> : vector<2x10xf32>
    %4 = tpu.matmul %2, %3, %cst_3 {dimension_numbers = #tpu.dot_dimension_numbers<[1], [1], [0], [0], [0, 0, 1, 0], [], []>} : vector<2x32xf32>, vector<10x32xf32>, vector<2x10xf32> -> vector<2x10xf32>
    %c0_4 = arith.constant 0 : index
    %c0_5 = arith.constant 0 : index
    %5 = vector.load %arg3[%c0_4, %c0_5] : memref<1x10xf32, #tpu.memory_space<vmem>>, vector<1x10xf32>
    %6 = vector.broadcast %5 : vector<1x10xf32> to vector<2x10xf32>
    %7 = arith.addf %4, %6 : vector<2x10xf32>
    %c0_6 = arith.constant 0 : index
    %c0_7 = arith.constant 0 : index
    %8 = vector.load %arg4[%c0_6, %c0_7] : memref<2x10xf32, #tpu.memory_space<vmem>>, vector<2x10xf32>
    tpu.vector_store %arg4[%c0_6, %c0_7], %7 {strides = array<i32>} : memref<2x10xf32, #tpu.memory_space<vmem>>, vector<2x10xf32>,
    return
  }
  func.func @transform_0(%arg0: i32) -> (i32, i32) {
    %c0_i32 = arith.constant 0 : i32
    %c0_i32_0 = arith.constant 0 : i32
    return %arg0, %c0_i32 : i32, i32
  }
  func.func @transform_1(%arg0: i32) -> (i32, i32) {
    %c0_i32 = arith.constant 0 : i32
    %c0_i32_0 = arith.constant 0 : i32
    %c0_i32_1 = arith.constant 0 : i32
    return %c0_i32, %c0_i32_0 : i32, i32
  }
  func.func @transform_2(%arg0: i32) -> (i32, i32) {
    %c0_i32 = arith.constant 0 : i32
    %c0_i32_0 = arith.constant 0 : i32
    %c0_i32_1 = arith.constant 0 : i32
    return %c0_i32, %c0_i32_0 : i32, i32
  }
  func.func @transform_3(%arg0: i32) -> (i32, i32) {
    %c0_i32 = arith.constant 0 : i32
    %c0_i32_0 = arith.constant 0 : i32
    return %arg0, %c0_i32 : i32, i32
  }
}

</mosaic_0001>

<llo_original>
// kernel: _lambda_.1
$region0: #{_lambda_.1}
  #allocation0 [shape = 'u32[]', space=smem, size = 0x4, offset = 0x4, fixed_abs, tag = 'smem constant byte address 0x4 - core index']
  #allocation1 [shape = 'u32[144,128]{1,0:T(1,128)}', space=vmem, size = 0x12000, scoped, tag = 'internal scratch']
  %s0 = inlined_call_operand.vmem [shape: f32[2,32], index: 0, kind: input, shape index: {}]
  %s1 = inlined_call_operand.hbm [shape: f32[10,32], index: 1, kind: input, shape index: {}]
  %s2 = inlined_call_operand.vmem [shape: f32[1,10], index: 2, kind: input, shape index: {}]
  %s3 = inlined_call_operand.hbm [shape: f32[2,10], index: 3, kind: output, shape index: {}]
  %s4 = sld [smem:[#allocation0]]
  $region26: #{_lambda_.1} parent=0
    _
  %s6 = ssub.s32 1, %s4
  %s7 = scalar_select 0, %s6, %s4
  $region1: #{_lambda_.1} parent=0
    #allocation2 [shape = 'u8[8192]{0}', space=vmem, size = 0x2000, scoped, tag = 'input window, operand 1, single buffered']
    #allocation3 [shape = 's32[1]{0}', space=sflag, size = 0x4, scoped, tag = 'scoped memory for _lambda_.1']
    #allocation4 [shape = 's32[1]{0}', space=sflag, size = 0x4, scoped, tag = 'scoped memory for _lambda_.1']
    #allocation5 [shape = 'u8[1024]{0}', space=vmem, size = 0x400, scoped, tag = 'output window, operand 0, single buffered']
    %8 = vsyncpa [#allocation3], 0
    %9 = vsyncpa [#allocation4], 0
    // Predicated region
    $region2: #{_lambda_.1} parent=1 // pred_check
      _
    $region3: #{_lambda_.1} parent=1 // pred_check_branch
      %11 = sbr.rel (0) target = $region5
    $region4: #{_lambda_.1} parent=1 // pred_region
      _
    $region5: #{_lambda_.1} parent=1 // pred_fallthru
      _
    // Predicated region
    $region6: #{_lambda_.1} parent=1 // pred_check
      _
    $region7: #{_lambda_.1} parent=1 // pred_check_branch
      %13 = sbr.rel (0) target = $region9
    $region8: #{_lambda_.1} parent=1 // pred_region
      %s15 = ssub.s32 256, 256
      %16 = vsyncadd [#allocation3], %s15
      %s17 = sshll.u32 [#allocation2], 4
      %s18 = int_to_ptr.vmem [resolvable:$true] %s17
      %23 = dma.hbm_to_vmem [thread:$0]  %s1, 256, %s18, [#allocation3], 128, 128, 8
    $region9: #{_lambda_.1} parent=1 // pred_fallthru
      _
    // Predicated region
    $region10: #{_lambda_.1} parent=1 // pred_check
      _
    $region11: #{_lambda_.1} parent=1 // pred_check_branch
      %25 = sbr.rel (0) target = $region13
    $region12: #{_lambda_.1} parent=1 // pred_region
      _
    $region13: #{_lambda_.1} parent=1 // pred_fallthru
      _
    // Predicated region
    $region14: #{_lambda_.1} parent=1 // pred_check
      _
    $region15: #{_lambda_.1} parent=1 // pred_check_branch
      %27 = sbr.rel (0) target = $region17
    $region16: #{_lambda_.1} parent=1 // pred_region
      %28 = dma.done [#allocation3], 256
    $region17: #{_lambda_.1} parent=1 // pred_fallthru
      _
    %v29 = vld [vmem:[%s0] sm:$0x3]
    %v30 = vmax.f32 %v29, 0.0
    %v31 = vld [vmem:[#allocation2] sm:$0xff]
    %v32 = vld [vmem:[#allocation2 + $0x8] sm:$0x3]
    %v33 = vld [vmem:[%s2] sm:$0x1]
    %v35 = vlaneseq
    %v36 = vshrl.u32 %v35, 7
    %v37 = vsub.s32 0, %v36
    %v38 = vrot.slane %v33, %v37
    %vm40 = vcmask 261120
    %v42 = vsel %vm40, %v30, 0
    %v45 = vsel %vm40, %v31, 0
    %v48 = vsel %vm40, %v32, 0
    %50 = vmatprep.subr.mxu0 0.0
    %51 = vmatpush1.xpose.msra.mxu0 %v45
    %52 = vmatprep.subr.mxu0 0.0
    %53 = vmatpush1.xpose.msra.mxu0 %v48
    %54 = vmatprep.subr.mxu0 0.0
    %55 = vmatpush1.xpose.msra.mxu0 0.0
    %56 = vmatprep.subr.mxu0 0.0
    %57 = vmatpush1.xpose.msra.mxu0 0.0
    %58 = vmatprep.subr.mxu0 0.0
    %59 = vmatpush1.xpose.msra.mxu0 0.0
    %60 = vmatprep.subr.mxu0 0.0
    %61 = vmatpush1.xpose.msra.mxu0 0.0
    %62 = vmatprep.subr.mxu0 0.0
    %63 = vmatpush1.xpose.msra.mxu0 0.0
    %64 = vmatprep.subr.mxu0 0.0
    %65 = vmatpush1.xpose.msra.mxu0 0.0
    %66 = vmatprep.subr.mxu0 0.0
    %67 = vmatpush1.xpose.msra.mxu0 0.0
    %68 = vmatprep.subr.mxu0 0.0
    %69 = vmatpush1.xpose.msra.mxu0 0.0
    %70 = vmatprep.subr.mxu0 0.0
    %71 = vmatpush1.xpose.msra.mxu0 0.0
    %72 = vmatprep.subr.mxu0 0.0
    %73 = vmatpush1.xpose.msra.mxu0 0.0
    %74 = vmatprep.subr.mxu0 0.0
    %75 = vmatpush1.xpose.msra.mxu0 0.0
    %76 = vmatprep.subr.mxu0 0.0
    %77 = vmatpush1.xpose.msra.mxu0 0.0
    %78 = vmatprep.subr.mxu0 0.0
    %79 = vmatpush1.xpose.msra.mxu0 0.0
    %80 = vmatprep.subr.mxu0 0.0
    %81 = vmatpush1.xpose.msra.mxu0 0.0
    %82 = vmatprep.subr.mxu0 0.0
    %83 = vmatpush1.xpose.msra.mxu0 0.0
    %84 = vmatprep.subr.mxu0 0.0
    %85 = vmatpush1.xpose.msra.mxu0 0.0
    %86 = vmatprep.subr.mxu0 0.0
    %87 = vmatpush1.xpose.msra.mxu0 0.0
    %88 = vmatprep.subr.mxu0 0.0
    %89 = vmatpush1.xpose.msra.mxu0 0.0
    %90 = vmatprep.subr.mxu0 0.0
    %91 = vmatpush1.xpose.msra.mxu0 0.0
    %92 = vmatprep.subr.mxu0 0.0
    %93 = vmatpush1.xpose.msra.mxu0 0.0
    %94 = vmatprep.subr.mxu0 0.0
    %95 = vmatpush1.xpose.msra.mxu0 0.0
    %96 = vmatprep.subr.mxu0 0.0
    %97 = vmatpush1.xpose.msra.mxu0 0.0
    %98 = vmatprep.subr.mxu0 0.0
    %99 = vmatpush1.xpose.msra.mxu0 0.0
    %100 = vmatprep.subr.mxu0 0.0
    %101 = vmatpush1.xpose.msra.mxu0 0.0
    %102 = vmatprep.subr.mxu0 0.0
    %103 = vmatpush1.xpose.msra.mxu0 0.0
    %104 = vmatprep.subr.mxu0 0.0
    %105 = vmatpush1.xpose.msra.mxu0 0.0
    %106 = vmatprep.subr.mxu0 0.0
    %107 = vmatpush1.xpose.msra.mxu0 0.0
    %108 = vmatprep.subr.mxu0 0.0
    %109 = vmatpush1.xpose.msra.mxu0 0.0
    %110 = vmatprep.subr.mxu0 0.0
    %111 = vmatpush1.xpose.msra.mxu0 0.0
    %112 = vmatprep.subr.mxu0 0.0
    %113 = vmatpush1.xpose.msra.mxu0 0.0
    %114 = vmatprep.mubr.f32.mxu0 0.0
    %115 = vmatmul.mubr.f32.gmra.mrb[0].mxu0 %v42
    %v116 = vpop.f32.mrb[0].mxu0
    %v117 = vadd.f32 %v38, %v116
    %v118 = vpop.f32.mrb[0].mxu0
    %119 = vdwg.mxu0
    %vm120 = vcmask 74752
    %121 = vst.msk [vmem:[#allocation5] sm:$0x3] %vm120, %v117
    // Predicated region
    $region18: #{_lambda_.1} parent=1 // pred_check
      _
    $region19: #{_lambda_.1} parent=1 // pred_check_branch
      %123 = sbr.rel (0) target = $region21
    $region20: #{_lambda_.1} parent=1 // pred_region
      %s125 = ssub.s32 32, 32
      %126 = vsyncadd [#allocation4], %s125
      %s128 = sshll.u32 [#allocation5], 4
      %s129 = int_to_ptr.vmem [resolvable:$true] %s128
      %131 = dma.vmem_to_hbm [thread:$0]  %s129, 32, %s3, [#allocation4]
    $region21: #{_lambda_.1} parent=1 // pred_fallthru
      _
    // Predicated region
    $region22: #{_lambda_.1} parent=1 // pred_check
      _
    $region23: #{_lambda_.1} parent=1 // pred_check_branch
      %133 = sbr.rel (0) target = $region25
    $region24: #{_lambda_.1} parent=1 // pred_region
      %134 = dma.done [#allocation4], 32
    $region25: #{_lambda_.1} parent=1 // pred_fallthru
      _
    %135 = vsyncpa [#allocation3], 1
    %136 = vsyncpa [#allocation4], 1

</llo_original>
